<compile_context>
chip_gen: v7x
topology: tpu7x:2x2x1
jax: 0.10.0
libtpu: 0.0.40
codegen_flags: <defaults>
</compile_context>

<pallas_src>
import functools

import jax
import jax.numpy as jnp
from jax.experimental import pallas as pl
from jax.experimental.pallas import tpu as pltpu


# ----------------------------------------------------------------------------
# Pallas kernels
# ----------------------------------------------------------------------------
def conv_kernel(a_ref, w_ref, shift_ref, o_ref, *, relu):
    """out = W_fold(N,K) @ cols(K,M) + shift, optional ReLU.  BN scale pre-folded."""
    acc = jnp.dot(w_ref[...], a_ref[...], preferred_element_type=jnp.float32)
    acc = acc + shift_ref[...]
    if relu:
        acc = jnp.maximum(acc, 0.0)
    o_ref[...] = acc.astype(o_ref.dtype)


def conv_residual_kernel(a_ref, w_ref, shift_ref, res_ref, o_ref):
    """out = relu(W_fold @ cols + shift + residual).  Fuses the BasicBlock tail."""
    acc = jnp.dot(w_ref[...], a_ref[...], preferred_element_type=jnp.float32)
    acc = acc + shift_ref[...] + res_ref[...].astype(jnp.float32)
    o_ref[...] = jnp.maximum(acc, 0.0).astype(o_ref.dtype)


def channel_attn_pool_kernel(x_ref, w_ref, b_ref, pool_ref):
    """Fused CBAM channel attention + channel-wise spatial pooling (per batch).

    x: (C, HW).  Global max/avg pool over HW -> shared MLP as a single dot
    (dot(mx,W)+b + dot(av,W)+b == dot(W^T, mx+av) + 2b) -> softmax over channels
    -> scale x -> channel-wise max/mean.  Only the (2, HW) spatial pools leave
    the kernel: downstream only consumes them, so the scaled map never hits HBM.
    """
    x = x_ref[...].astype(jnp.float32)                       # (C, HW)
    mx = jnp.max(x, axis=1, keepdims=True)                   # (C, 1)
    av = jnp.mean(x, axis=1, keepdims=True)                  # (C, 1)
    h = jnp.dot(w_ref[...], mx + av,
                preferred_element_type=jnp.float32) + 2.0 * b_ref[...]
    h = h - jnp.max(h, axis=0, keepdims=True)                # softmax over channels
    e = jnp.exp(h)
    attn = e / jnp.sum(e, axis=0, keepdims=True)             # (C, 1)
    oc = x * attn                                            # channel-scaled map
    pool_ref[0:1, :] = jnp.max(oc, axis=0, keepdims=True)    # (1, HW)
    pool_ref[1:2, :] = jnp.mean(oc, axis=0, keepdims=True)   # (1, HW)


def spatial_attn_kernel(cols_ref, w_ref, b_ref, x_ref, o_ref):
    """Fused CBAM spatial attention (per batch): 3x3 (2->1) conv as a VPU weighted
    sum over the 18 im2col taps, softmax over spatial positions, relu(attn*x + x)."""
    cols = cols_ref[...]                                               # (18, HW)
    logits = jnp.sum(cols * w_ref[...], axis=0, keepdims=True) + b_ref[...]   # (1, HW)
    logits = logits - jnp.max(logits, axis=1, keepdims=True)           # softmax over HW
    e = jnp.exp(logits)
    attn = e / jnp.sum(e, axis=1, keepdims=True)                       # (1, HW)
    x = x_ref[...].astype(jnp.float32)                                 # (C, HW)
    o_ref[...] = jnp.maximum(x * attn + x, 0.0).astype(o_ref.dtype)


def pool_linear_kernel(x_ref, w_ref, b_ref, o_ref):
    """Global 4x4 avg-pool (== mean over remaining HW) fused with the final Linear."""
    p = jnp.mean(x_ref[...].astype(jnp.float32), axis=-1)              # (B, C)
    o_ref[...] = jnp.dot(p, w_ref[...], preferred_element_type=jnp.float32) + b_ref[...]


# ----------------------------------------------------------------------------
# Pallas wrappers
# ----------------------------------------------------------------------------
def matmul_bn(a, w_fold, shift, residual=None, relu=False):
    """a: (B, K, M) bf16, w_fold: (N, K) bf16, shift: (N, 1) f32,
    residual: optional (B, N, M) bf16.  Returns (B, N, M) bf16 (lane dim = M)."""
    B, K, M = a.shape
    N = w_fold.shape[0]
    a_spec = pl.BlockSpec((None, K, M), lambda b: (b, 0, 0))
    w_spec = pl.BlockSpec((N, K), lambda b: (0, 0))
    s_spec = pl.BlockSpec((N, 1), lambda b: (0, 0))
    r_spec = pl.BlockSpec((None, N, M), lambda b: (b, 0, 0))
    o_spec = pl.BlockSpec((None, N, M), lambda b: (b, 0, 0))
    if residual is None:
        kern = functools.partial(conv_kernel, relu=relu)
        in_specs = [a_spec, w_spec, s_spec]
        args = (a, w_fold, shift)
    else:
        kern = conv_residual_kernel
        in_specs = [a_spec, w_spec, s_spec, r_spec]
        args = (a, w_fold, shift, residual)
    return pl.pallas_call(
        kern,
        out_shape=jax.ShapeDtypeStruct((B, N, M), jnp.bfloat16),
        grid=(B,),
        in_specs=in_specs,
        out_specs=o_spec,
        compiler_params=pltpu.CompilerParams(dimension_semantics=("parallel",)),
    )(*args)


def channel_attn_pools(x_flat, mlp_wT, mlp_b):
    """x_flat: (B, C, HW) bf16 -> (B, 2, HW) f32 [max-pool row, mean-pool row]."""
    B, C, HW = x_flat.shape
    return pl.pallas_call(
        channel_attn_pool_kernel,
        out_shape=jax.ShapeDtypeStruct((B, 2, HW), jnp.float32),
        grid=(B,),
        in_specs=[pl.BlockSpec((None, C, HW), lambda b: (b, 0, 0)),
                  pl.BlockSpec((C, C), lambda b: (0, 0)),
                  pl.BlockSpec((C, 1), lambda b: (0, 0))],
        out_specs=pl.BlockSpec((None, 2, HW), lambda b: (b, 0, 0)),
        compiler_params=pltpu.CompilerParams(dimension_semantics=("parallel",)),
    )(x_flat, mlp_wT, mlp_b.reshape(C, 1))


def spatial_attn_fused(cols, w_sp, b_sp, x_flat):
    """cols: (B, 18, HW) f32, w_sp: (18, 1) f32, x_flat: (B, C, HW) bf16."""
    B, C, HW = x_flat.shape
    K = cols.shape[1]
    return pl.pallas_call(
        spatial_attn_kernel,
        out_shape=jax.ShapeDtypeStruct((B, C, HW), jnp.bfloat16),
        grid=(B,),
        in_specs=[pl.BlockSpec((None, K, HW), lambda b: (b, 0, 0)),
                  pl.BlockSpec((K, 1), lambda b: (0, 0)),
                  pl.BlockSpec((1, 1), lambda b: (0, 0)),
                  pl.BlockSpec((None, C, HW), lambda b: (b, 0, 0))],
        out_specs=pl.BlockSpec((None, C, HW), lambda b: (b, 0, 0)),
        compiler_params=pltpu.CompilerParams(dimension_semantics=("parallel",)),
    )(cols, w_sp, b_sp.reshape(1, 1), x_flat)


def pool_linear(x_flat, w, b):
    B = x_flat.shape[0]
    N = w.shape[1]
    return pl.pallas_call(
        pool_linear_kernel,
        out_shape=jax.ShapeDtypeStruct((B, N), jnp.float32),
    )(x_flat, w, b.reshape(1, N))


# ----------------------------------------------------------------------------
# JAX glue: channels-first im2col + conv/BN wrapper, BasicBlock, full forward
# ----------------------------------------------------------------------------
def im2col_nchw(x, kh, kw, stride, padding):
    """x: (B, C, H, W) -> (B, kh*kw*C, Ho*Wo), tap-major (i, j, c) ordering.

    TODO(synk): this materializes the activation kh*kw times in HBM; an in-kernel
    tap walk over the padded input would cut that traffic ~9x.
    """
    B, C, H, W = x.shape
    if padding:
        x = jnp.pad(x, ((0, 0), (0, 0), (padding, padding), (padding, padding)))
    Ho = (H + 2 * padding - kh) // stride + 1
    Wo = (W + 2 * padding - kw) // stride + 1
    cols = []
    for i in range(kh):
        for j in range(kw):
            cols.append(x[:, :, i:i + stride * (Ho - 1) + 1:stride,
                          j:j + stride * (Wo - 1) + 1:stride])
    cols = jnp.concatenate(cols, axis=1)                      # (B, kh*kw*C, Ho, Wo)
    return cols.reshape(B, kh * kw * C, Ho * Wo), Ho, Wo


def conv_bn(x, w, scale, shift, stride, padding, relu=False, residual=None):
    """x: (B, Cin, H, W) bf16; w: (kh, kw, Cin, Cout) f32; BN folded in eval mode.

    The BN scale is folded into the (transposed, bf16) weight once; the kernel only
    adds the shift (and optional residual) and applies ReLU, all in f32.
    """
    kh, kw, cin, cout = w.shape
    cols, Ho, Wo = im2col_nchw(x, kh, kw, stride, padding)    # bf16 (B, K, Ho*Wo)
    w_fold = (w.reshape(kh * kw * cin, cout).T * scale[:, None]).astype(jnp.bfloat16)
    y = matmul_bn(cols, w_fold, shift.reshape(cout, 1).astype(jnp.float32),
                  residual=residual, relu=relu)
    B = x.shape[0]
    return y.reshape(B, cout, Ho, Wo)


def basic_block(x, p):
    stride = p["stride"]
    out = conv_bn(x, p["conv1_w"], p["bn1_s"], p["bn1_b"], stride, 1, relu=True)
    if "sc_w" in p:
        sc = conv_bn(x, p["sc_w"], p["bnsc_s"], p["bnsc_b"], stride, 0, relu=False)
    else:
        sc = x                                                # identity shortcut
    B, cout, Ho, Wo = out.shape
    res = sc.reshape(B, cout, Ho * Wo)
    # conv2 + bn2 + residual add + ReLU fused into a single kernel.
    out = conv_bn(out, p["conv2_w"], p["bn2_s"], p["bn2_b"], 1, 1,
                  relu=True, residual=res)
    return out


def run_layer(x, blocks):
    for p in blocks:
        x = basic_block(x, p)
    return x


def forward(params, x_nchw):
    x = x_nchw.astype(jnp.bfloat16)                           # keep NCHW: C on sublanes, H*W on lanes
    out = conv_bn(x, params["conv1_w"], params["bn1_s"], params["bn1_b"],
                  stride=1, padding=1, relu=False)            # bn1(conv1(x)), (B, C0, 32, 32)
    B, C, H, W = out.shape
    out_flat = out.reshape(B, C, H * W)

    # --- channel attention (fused with the spatial max/mean pooling) ---
    # TODO(synk): reference uses undefined max/avg_pooling_channel, a broken
    # .view((B,1)) and nn.Linear(3,64); standard CBAM channel attention (global
    # max+avg pool -> shared MLP (C->C) -> softmax over channels) is used instead.
    pooled = channel_attn_pools(out_flat, params["mlp_w"].T, params["mlp_b"])  # (B, 2, HW)

    # --- spatial attention (fused: 3x3 2->1 conv + softmax over HW + attn*x + x + ReLU) ---
    # TODO(synk): nn.conv_spatial does not exist and both spatial "pools" are
    # MaxPool2d((1,2)) on a broken view; CBAM spatial attention is used instead.
    cols_sp, _, _ = im2col_nchw(pooled.reshape(B, 2, H, W), 3, 3, 1, 1)        # (B, 18, HW)
    out = spatial_attn_fused(cols_sp, params["conv_spatial_w"].reshape(18, 1),
                             params["conv_spatial_b"], out_flat)               # (B, C, HW)
    out = out.reshape(B, C, H, W)

    # TODO(synk): layer1 is constructed in __init__ but never used in the
    # reference forward(); it is initialized (params['layer1']) and skipped here too.
    out = run_layer(out, params["layer2"])
    out = run_layer(out, params["layer3"])
    # TODO(synk): reference applies layer4 to undefined `out_high_freq`; using `out`.
    out = run_layer(out, params["layer4"])

    B2, C2, H2, W2 = out.shape
    logits = pool_linear(out.reshape(B2, C2, H2 * W2),
                         params["linear_w"], params["linear_b"])
    return logits


# ----------------------------------------------------------------------------
# Deterministic parameter construction (synthetic; mirrors the module's shapes)
# ----------------------------------------------------------------------------
class KeyGen:
    def __init__(self, seed):
        self.key = jax.random.PRNGKey(seed)

    def __call__(self):
        self.key, k = jax.random.split(self.key)
        return k


def init_bn(kg, c):
    gamma = 1.0 + 0.1 * jax.random.normal(kg(), (c,), jnp.float32)
    beta = 0.1 * jax.random.normal(kg(), (c,), jnp.float32)
    mean = 0.1 * jax.random.normal(kg(), (c,), jnp.float32)
    var = 1.0 + 0.1 * jnp.abs(jax.random.normal(kg(), (c,), jnp.float32))
    # TODO(synk): BatchNorm folded in eval mode (running stats), not train-mode batch stats.
    scale = gamma / jnp.sqrt(var + 1e-5)
    shift = beta - mean * scale
    return scale, shift


def init_block(kg, in_c, out_c, stride):
    p = {"stride": stride}
    p["conv1_w"] = 0.1 * jax.random.normal(kg(), (3, 3, in_c, out_c), jnp.float32)
    p["bn1_s"], p["bn1_b"] = init_bn(kg, out_c)
    p["conv2_w"] = 0.1 * jax.random.normal(kg(), (3, 3, out_c, out_c), jnp.float32)
    p["bn2_s"], p["bn2_b"] = init_bn(kg, out_c)
    if stride != 1 or in_c != out_c:
        p["sc_w"] = 0.1 * jax.random.normal(kg(), (1, 1, in_c, out_c), jnp.float32)
        p["bnsc_s"], p["bnsc_b"] = init_bn(kg, out_c)
    return p


def init_params(kg, div=8, num_blocks=(1, 1, 1, 1), num_classes=10):
    c0 = 64 // div
    p = {}
    p["conv1_w"] = 0.1 * jax.random.normal(kg(), (3, 3, 3, c0), jnp.float32)
    p["bn1_s"], p["bn1_b"] = init_bn(kg, c0)
    p["mlp_w"] = 0.1 * jax.random.normal(kg(), (c0, c0), jnp.float32)
    p["mlp_b"] = 0.1 * jax.random.normal(kg(), (c0,), jnp.float32)
    p["conv_spatial_w"] = 0.1 * jax.random.normal(kg(), (3, 3, 2, 1), jnp.float32)
    p["conv_spatial_b"] = 0.1 * jax.random.normal(kg(), (1,), jnp.float32)

    in_c = c0
    layer_cfg = [("layer1", 64 // div, 1, num_blocks[0]),
                 ("layer2", 128 // div, 2, num_blocks[1]),
                 ("layer3", 256 // div, 2, num_blocks[2]),
                 ("layer4", 512 // div, 2, num_blocks[3])]
    for name, planes, stride, nb in layer_cfg:
        blocks = []
        for s in [stride] + [1] * (nb - 1):
            blocks.append(init_block(kg, in_c, planes, s))
            in_c = planes  # BasicBlock expansion = 1
        p[name] = blocks

    p["linear_w"] = 0.1 * jax.random.normal(kg(), (512 // div, num_classes), jnp.float32)
    p["linear_b"] = 0.1 * jax.random.normal(kg(), (num_classes,), jnp.float32)
    return p


# ----------------------------------------------------------------------------
if __name__ == "__main__":
    kg = KeyGen(0)
    params = init_params(kg, div=8, num_blocks=(1, 1, 1, 1), num_classes=10)
    # CIFAR-like input so the final 4x4 avg-pool is well defined: (B=2, 3, 32, 32) NCHW.
    x = jax.random.normal(jax.random.PRNGKey(0), (2, 3, 32, 32), jnp.float32)
    out = forward(params, x)
    out = jax.block_until_ready(out)
    assert out.shape == (2, 10) and out.dtype == jnp.float32
    assert bool(jnp.all(jnp.isfinite(out)))
    print("KERNEL_OK")
</pallas_src>

<mosaic_0001>
module attributes {stable_mosaic.version = 11 : i64} {
  func.func @conv_kernel(%arg0: i32, %arg1: memref<1x27x1024xbf16, #tpu.memory_space<vmem>>, %arg2: memref<8x27xbf16, #tpu.memory_space<vmem>>, %arg3: memref<8x1xf32, #tpu.memory_space<vmem>>, %arg4: memref<1x8x1024xbf16, #tpu.memory_space<vmem>>) attributes {dimension_semantics = [#tpu.dimension_semantics<parallel>], iteration_bounds = array<i64: 2>, scalar_prefetch = 0 : i64, scratch_operands = 0 : i64, tpu.core_type = #tpu.core_type<tc>, window_params = [{transform_indices = @transform_0, window_bounds = array<i64: 1, 27, 1024>}, {pipeline_mode = #tpu.pipeline_mode<synchronous>, transform_indices = @transform_1, window_bounds = array<i64: 8, 27>}, {pipeline_mode = #tpu.pipeline_mode<synchronous>, transform_indices = @transform_2, window_bounds = array<i64: 8, 1>}, {transform_indices = @transform_3, window_bounds = array<i64: 1, 8, 1024>}]} {
    %c0 = arith.constant 0 : index
    %c0_0 = arith.constant 0 : index
    %0 = vector.load %arg2[%c0, %c0_0] : memref<8x27xbf16, #tpu.memory_space<vmem>>, vector<8x27xbf16>
    %c0_1 = arith.constant 0 : index
    %c0_2 = arith.constant 0 : index
    %c0_3 = arith.constant 0 : index
    %1 = vector.load %arg1[%c0_1, %c0_2, %c0_3] : memref<1x27x1024xbf16, #tpu.memory_space<vmem>>, vector<1x27x1024xbf16>
    %2 = vector.shape_cast %1 : vector<1x27x1024xbf16> to vector<27x1024xbf16>
    %cst = arith.constant dense<0.000000e+00> : vector<8x1024xf32>
    %3 = tpu.matmul %0, %2, %cst {dimension_numbers = #tpu.dot_dimension_numbers<[1], [0], [0], [1], [0, 0, 1, 1], [], []>} : vector<8x27xbf16>, vector<27x1024xbf16>, vector<8x1024xf32> -> vector<8x1024xf32>
    %c0_4 = arith.constant 0 : index
    %c0_5 = arith.constant 0 : index
    %4 = vector.load %arg3[%c0_4, %c0_5] : memref<8x1xf32, #tpu.memory_space<vmem>>, vector<8x1xf32>
    %5 = vector.broadcast %4 : vector<8x1xf32> to vector<8x1024xf32>
    %6 = arith.addf %3, %5 : vector<8x1024xf32>
    %7 = arith.truncf %6 : vector<8x1024xf32> to vector<8x1024xbf16>
    %c0_6 = arith.constant 0 : index
    %c0_7 = arith.constant 0 : index
    %c0_8 = arith.constant 0 : index
    %8 = vector.load %arg4[%c0_6, %c0_7, %c0_8] : memref<1x8x1024xbf16, #tpu.memory_space<vmem>>, vector<1x8x1024xbf16>
    %9 = vector.shape_cast %8 : vector<1x8x1024xbf16> to vector<8x1024xbf16>
    %10 = vector.shape_cast %7 : vector<8x1024xbf16> to vector<1x8x1024xbf16>
    tpu.vector_store %arg4[%c0_6, %c0_7, %c0_8], %10 {strides = array<i32>} : memref<1x8x1024xbf16, #tpu.memory_space<vmem>>, vector<1x8x1024xbf16>,
    return
  }
  func.func @transform_0(%arg0: i32) -> (i32, i32, i32) {
    %c0_i32 = arith.constant 0 : i32
    %c0_i32_0 = arith.constant 0 : i32
    %c0_i32_1 = arith.constant 0 : i32
    return %arg0, %c0_i32, %c0_i32_0 : i32, i32, i32
  }
  func.func @transform_1(%arg0: i32) -> (i32, i32) {
    %c0_i32 = arith.constant 0 : i32
    %c0_i32_0 = arith.constant 0 : i32
    %c0_i32_1 = arith.constant 0 : i32
    return %c0_i32, %c0_i32_0 : i32, i32
  }
  func.func @transform_2(%arg0: i32) -> (i32, i32) {
    %c0_i32 = arith.constant 0 : i32
    %c0_i32_0 = arith.constant 0 : i32
    %c0_i32_1 = arith.constant 0 : i32
    return %c0_i32, %c0_i32_0 : i32, i32
  }
  func.func @transform_3(%arg0: i32) -> (i32, i32, i32) {
    %c0_i32 = arith.constant 0 : i32
    %c0_i32_0 = arith.constant 0 : i32
    %c0_i32_1 = arith.constant 0 : i32
    return %arg0, %c0_i32, %c0_i32_0 : i32, i32, i32
  }
}

</mosaic_0001>

<llo_original>
// kernel: tpu_custom_call.1
$region0: #{tpu_custom_call.1}
  #allocation0 [shape = 'u32[]', space=smem, size = 0x4, offset = 0x4, fixed_abs, tag = 'smem constant byte address 0x4 - core index']
  #allocation1 [shape = 'u32[144,128]{1,0:T(1,128)}', space=vmem, size = 0x12000, scoped, tag = 'internal scratch']
  %s0 = inlined_call_operand.vmem [shape: bf16[2,27,1024], index: 0, kind: input, shape index: {}]
  %s1 = inlined_call_operand.vmem [shape: bf16[8,27], index: 1, kind: input, shape index: {}]
  %s2 = inlined_call_operand.vmem [shape: f32[8,1], index: 2, kind: input, shape index: {}]
  %s3 = inlined_call_operand.hbm [shape: bf16[2,8,1024], index: 3, kind: output, shape index: {}]
  %s4 = sld [smem:[#allocation0]]
  $region45: #{tpu_custom_call.1} parent=0
    _
  %s6 = ssub.s32 1, %s4
  %s7 = scalar_select 0, %s6, %s4
  $region1: #{tpu_custom_call.1} parent=0
    #allocation2 [shape = 'u8[32768]{0}', space=vmem, size = 0x8000, scoped, tag = 'output window, operand 0']
    #allocation3 [shape = 's32[2]{0}', space=sflag, size = 0x8, scoped, tag = 'scoped memory for tpu_custom_call.1']
    %8 = vsyncpa [#allocation3], 0
    %s9 = scalar_lea.sflag [#allocation3], 1
    %10 = vsyncpa %s9, 0
    loop: start=0, step=1, limit=4
    $region2: #{tpu_custom_call.1} parent=1 // loop_pre_header
      _
    $region3: #{tpu_custom_call.1} parent=1 // loop_header
      %s12 = sphi 0, %s16
      %p13 = scmp.ge.s32.totalorder %s12, 4
      %s22 = sphi 0, %s24
      %s25 = sphi 0, %s22
      %s26 = sphi 0, %s25
      %s42 = sphi 0, %s26
      %s46 = sphi 0, %s46
      %s48 = sphi 0, %s46
      %s49 = sphi 0, %s48
      %s63 = sphi 0, %s49
      %s67 = sphi 0, %s67
      %s69 = sphi 0, %s67
      %s70 = sphi 0, %s69
      %s84 = sphi 0, %s70
      %s90 = sphi 0, %s92
      %s93 = sphi 0, %s90
      %s94 = sphi 0, %s93
      %s110 = sphi 0, %s94
    $region4: #{tpu_custom_call.1} parent=1 // loop_header_branch
      %15 = sbr.rel (%p13) target = $region8
    $region5: #{tpu_custom_call.1} parent=1 // loop_body
      %s17 = ssub.s32 %s12, 1
      %s18 = ssub.s32 %s12, 2
      %s19 = sadd.s32 %s12, 1
      %s20 = ssub.s32 %s12, %s19
      %p21 = scmp.eq.s32.totalorder %s20, 0
      %s23 = sadd.s32 %s22, 1
      %s24 = scalar_select %p21, %s22, %s23
      %p27 = pneg %p21
      %p28 = scmp.eq.s32.totalorder %s12, 1
      %p29 = por %p27, %p28
      %p30 = scmp.ne.s32.totalorder %s22, %s25
      %p31 = scmp.eq.s32.totalorder %s12, 0
      %p32 = por %p30, %p31
      %p33 = scmp.ne.s32.totalorder %s22, %s25
      %p34 = scmp.eq.s32.totalorder %s17, 1
      %p35 = por %p33, %p34
      %p36 = scmp.ne.s32.totalorder %s25, %s26
      %p37 = scmp.eq.s32.totalorder %s17, 0
      %p38 = por %p36, %p37
      %p39 = scmp.ne.s32.totalorder %s25, %s26
      %p40 = scmp.eq.s32.totalorder %s18, 1
      %p41 = por %p39, %p40
      %p43 = scmp.ne.s32.totalorder %s26, %s42
      %p44 = scmp.eq.s32.totalorder %s18, 0
      %p45 = por %p43, %p44
      %s47 = sadd.s32 %s46, 1
      %p50 = scmp.eq.s32.totalorder %s12, 1
      %p51 = scmp.ne.s32.totalorder %s46, %s48
      %p52 = scmp.eq.s32.totalorder %s12, 0
      %p53 = por %p51, %p52
      %p54 = scmp.ne.s32.totalorder %s46, %s48
      %p55 = scmp.eq.s32.totalorder %s17, 1
      %p56 = por %p54, %p55
      %p57 = scmp.ne.s32.totalorder %s48, %s49
      %p58 = scmp.eq.s32.totalorder %s17, 0
      %p59 = por %p57, %p58
      %p60 = scmp.ne.s32.totalorder %s48, %s49
      %p61 = scmp.eq.s32.totalorder %s18, 1
      %p62 = por %p60, %p61
      %p64 = scmp.ne.s32.totalorder %s49, %s63
      %p65 = scmp.eq.s32.totalorder %s18, 0
      %p66 = por %p64, %p65
      %s68 = sadd.s32 %s67, 1
      %p71 = scmp.eq.s32.totalorder %s12, 1
      %p72 = scmp.ne.s32.totalorder %s67, %s69
      %p73 = scmp.eq.s32.totalorder %s12, 0
      %p74 = por %p72, %p73
      %p75 = scmp.ne.s32.totalorder %s67, %s69
      %p76 = scmp.eq.s32.totalorder %s17, 1
      %p77 = por %p75, %p76
      %p78 = scmp.ne.s32.totalorder %s69, %s70
      %p79 = scmp.eq.s32.totalorder %s17, 0
      %p80 = por %p78, %p79
      %p81 = scmp.ne.s32.totalorder %s69, %s70
      %p82 = scmp.eq.s32.totalorder %s18, 1
      %p83 = por %p81, %p82
      %p85 = scmp.ne.s32.totalorder %s70, %s84
      %p86 = scmp.eq.s32.totalorder %s18, 0
      %p87 = por %p85, %p86
      %s88 = ssub.s32 %s12, %s19
      %p89 = scmp.eq.s32.totalorder %s88, 0
      %s91 = sadd.s32 %s90, 1
      %s92 = scalar_select %p89, %s90, %s91
      %p95 = pneg %p89
      %p96 = scmp.eq.s32.totalorder %s12, 1
      %p97 = por %p95, %p96
      %p98 = scmp.ne.s32.totalorder %s90, %s93
      %p99 = scmp.eq.s32.totalorder %s12, 0
      %p100 = por %p98, %p99
      %p101 = scmp.ne.s32.totalorder %s90, %s93
      %p102 = scmp.eq.s32.totalorder %s17, 1
      %p103 = por %p101, %p102
      %p104 = scmp.ne.s32.totalorder %s93, %s94
      %p105 = scmp.eq.s32.totalorder %s17, 0
      %p106 = por %p104, %p105
      %p107 = scmp.ne.s32.totalorder %s93, %s94
      %p108 = scmp.eq.s32.totalorder %s18, 1
      %p109 = por %p107, %p108
      %p111 = scmp.ne.s32.totalorder %s94, %s110
      %p112 = scmp.eq.s32.totalorder %s18, 0
      %p113 = por %p111, %p112
      %p114 = scmp.le.s32.totalorder 1, %s12
      %p115 = scmp.lt.s32.totalorder %s12, 3
      %p116 = pnand %p114, %p115
      %p117 = pneg %p116
      // Predicated region
      $region9: #{tpu_custom_call.1} parent=5 // pred_check
        _
      $region10: #{tpu_custom_call.1} parent=5 // pred_check_branch
        %119 = sbr.rel (%p116) target = $region12
      $region11: #{tpu_custom_call.1} parent=5 // pred_region
        %s120 = ssub.s32 %s12, 1
        // Predicated region
        $region13: #{tpu_custom_call.1} parent=11 // pred_check
          %p121 = pneg %p59
        $region14: #{tpu_custom_call.1} parent=11 // pred_check_branch
          %123 = sbr.rel (%p121) target = $region16
        $region15: #{tpu_custom_call.1} parent=11 // pred_region
          _
        $region16: #{tpu_custom_call.1} parent=11 // pred_fallthru
          _
        // Predicated region
        $region17: #{tpu_custom_call.1} parent=11 // pred_check
          %p124 = pneg %p80
        $region18: #{tpu_custom_call.1} parent=11 // pred_check_branch
          %126 = sbr.rel (%p124) target = $region20
        $region19: #{tpu_custom_call.1} parent=11 // pred_region
          _
        $region20: #{tpu_custom_call.1} parent=11 // pred_fallthru
          _
      $region12: #{tpu_custom_call.1} parent=5 // pred_fallthru
        _
      %p127 = scmp.lt.s32.totalorder %s12, 2
      // Predicated region
      $region21: #{tpu_custom_call.1} parent=5 // pred_check
        %p128 = pneg %p127
      $region22: #{tpu_custom_call.1} parent=5 // pred_check_branch
        %130 = sbr.rel (%p128) target = $region24
      $region23: #{tpu_custom_call.1} parent=5 // pred_region
        // Predicated region
        $region25: #{tpu_custom_call.1} parent=23 // pred_check
          %p131 = pneg %p32
        $region26: #{tpu_custom_call.1} parent=23 // pred_check_branch
          %133 = sbr.rel (%p131) target = $region28
        $region27: #{tpu_custom_call.1} parent=23 // pred_region
          %p134 = scmp.lt.s32.totalorder %s12, 1
          %s135 = scalar_select %p134, %s12, 1
          %s136 = smul.addr %s135, 32
          %s137 = smul.addr %s136, 4
          %s138 = scalar_lea.vmem %s0, %s137
        $region28: #{tpu_custom_call.1} parent=23 // pred_fallthru
          _
      $region24: #{tpu_custom_call.1} parent=5 // pred_fallthru
        _
      %p139 = scmp.le.s32.totalorder 1, %s12
      %p140 = scmp.lt.s32.totalorder %s12, 3
      %p141 = pnand %p139, %p140
      %p142 = pneg %p141
      // Predicated region
      $region29: #{tpu_custom_call.1} parent=5 // pred_check
        _
      $region30: #{tpu_custom_call.1} parent=5 // pred_check_branch
        %144 = sbr.rel (%p141) target = $region32
      $region31: #{tpu_custom_call.1} parent=5 // pred_region
        %s145 = ssub.s32 %s12, 1
        %p146 = scmp.lt.s32.totalorder %s17, 1
        %s147 = scalar_select %p146, %s17, 1
        %s148 = smul.addr %s147, 32
        %s149 = smul.addr %s148, 4
        %s150 = scalar_lea.vmem %s0, %s149
        %p151 = pneg %p38
        %p152 = pneg %p35
        %p153 = pneg %p59
        %p154 = pneg %p56
        %p155 = pneg %p80
        %p156 = pneg %p77
        %p157 = pneg %p106
        %p158 = pneg %p103
        %s159 = sand.u32 %s93, 1
        %s160 = scalar_lea.sflag [#allocation3], %s159
        %s161 = sand.u32 %s93, 1
        %s162 = smul.addr %s161, 32
        %s163 = scalar_lea.vmem [#allocation2], %s162
        %p164 = scmp.lt.s32.totalorder %s17, 1
        %s165 = scalar_select %p164, %s17, 1
        %s166 = smul.addr %s165, 32
        %s167 = smul.addr %s166, 4
        %s168 = scalar_lea.vmem %s0, %s167
        %v170 = vld [vmem:[%s1] sm:$0xf]
        %v171 = vld [vmem:[%s168] sm:$0xff]
        %v172 = vld [vmem:[%s168 + $0x8] sm:$0xff]
        %v173 = vld [vmem:[%s168 + $0x10] sm:$0xff]
        %v174 = vld [vmem:[%s168 + $0x18] sm:$0xff]
        %v175 = vld [vmem:[%s168 + $0x20] sm:$0xff]
        %v176 = vld [vmem:[%s168 + $0x28] sm:$0xff]
        %v177 = vld [vmem:[%s168 + $0x30] sm:$0xff]
        %v178 = vld [vmem:[%s168 + $0x38] sm:$0xff]
        %v179 = vld [vmem:[%s168 + $0x40] sm:$0xff]
        %v180 = vld [vmem:[%s168 + $0x48] sm:$0xff]
        %v181 = vld [vmem:[%s168 + $0x50] sm:$0xff]
        %v182 = vld [vmem:[%s168 + $0x58] sm:$0xff]
        %v183 = vld [vmem:[%s168 + $0x60] sm:$0x33]
        %v184 = vld [vmem:[%s168 + $0x68] sm:$0x33]
        %v185 = vld [vmem:[%s168 + $0x70] sm:$0x33]
        %v186 = vld [vmem:[%s168 + $0x78] sm:$0x33]
        %v187 = vld [vmem:[%s2] sm:$0xff]
        %189 = vset.pattern.permute.xlu0 0
        %190 = vperm.xlu0 %189, %v187
        %v191 = vpop.permute.xlu0 %190
        %v209 = vunpack.c.l.b16 %v171
        %v210 = vunpack.c.h.b16 %v171
        %v211 = vunpack.c.l.b16 %v172
        %v212 = vunpack.c.h.b16 %v172
        %v213 = vunpack.c.l.b16 %v173
        %v214 = vunpack.c.h.b16 %v173
        %v215 = vunpack.c.l.b16 %v174
        %v216 = vunpack.c.h.b16 %v174
        %v217 = vunpack.c.l.b16 %v175
        %v218 = vunpack.c.h.b16 %v175
        %v219 = vunpack.c.l.b16 %v176
        %v220 = vunpack.c.h.b16 %v176
        %v221 = vunpack.c.l.b16 %v177
        %v222 = vunpack.c.h.b16 %v177
        %v223 = vunpack.c.l.b16 %v178
        %v224 = vunpack.c.h.b16 %v178
        %v225 = vunpack.c.l.b16 %v179
        %v226 = vunpack.c.h.b16 %v179
        %v227 = vunpack.c.l.b16 %v180
        %v228 = vunpack.c.h.b16 %v180
        %v229 = vunpack.c.l.b16 %v181
        %v230 = vunpack.c.h.b16 %v181
        %v231 = vunpack.c.l.b16 %v182
        %v232 = vunpack.c.h.b16 %v182
        %v233 = vunpack.c.l.b16 %v183
        %v234 = vunpack.c.h.b16 %v183
        %v235 = vunpack.c.l.b16 %v184
        %v236 = vunpack.c.h.b16 %v184
        %v237 = vunpack.c.l.b16 %v185
        %v238 = vunpack.c.h.b16 %v185
        %v239 = vunpack.c.l.b16 %v186
        %v240 = vunpack.c.h.b16 %v186
        %v241 = vpack.c.b16 %v217, %v209
        %v242 = vpack.c.b16 %v218, %v210
        %v243 = vpack.c.b16 %v219, %v211
        %v244 = vpack.c.b16 %v220, %v212
        %v245 = vpack.c.b16 %v221, %v213
        %v246 = vpack.c.b16 %v222, %v214
        %v247 = vpack.c.b16 %v223, %v215
        %v248 = vpack.c.b16 %v224, %v216
        %v249 = vpack.c.b16 %v233, %v225
        %v250 = vpack.c.b16 %v234, %v226
        %v251 = vpack.c.b16 %v235, %v227
        %v252 = vpack.c.b16 %v236, %v228
        %v253 = vpack.c.b16 %v237, %v229
        %v254 = vpack.c.b16 %v238, %v230
        %v255 = vpack.c.b16 %v239, %v231
        %v256 = vpack.c.b16 %v240, %v232
        %vm265 = vcmask 220160
        %v267 = vsel %vm265, %v170, 0
        %vm269 = vcmask 1044480
        %vm270 = vcmask 1045504
        %v271 = vsel %vm269, 4294967295, 65535
        %v272 = vsel %vm270, %v271, 0
        %v274 = vand.u32 %v249, %v272
        %v277 = vand.u32 %v250, %v272
        %v280 = vand.u32 %v251, %v272
        %v283 = vand.u32 %v252, %v272
        %v286 = vand.u32 %v253, %v272
        %v289 = vand.u32 %v254, %v272
        %v292 = vand.u32 %v255, %v272
        %v295 = vand.u32 %v256, %v272
        %297 = vmatprep.subr.bf16.mxu0 %v242
        %298 = vmatpush1.bf16.msra.mxu0 %v241
        %299 = vmatprep.subr.bf16.mxu0 %v277
        %300 = vmatpush1.bf16.msra.mxu0 %v274
        %301 = vmatprep.subr.bf16.mxu0 0
        %302 = vmatpush1.bf16.msra.mxu0 0
        %303 = vmatprep.subr.bf16.mxu0 0
        %304 = vmatpush1.bf16.msra.mxu0 0
        %305 = vmatprep.subr.bf16.mxu0 0
        %306 = vmatpush1.bf16.msra.mxu0 0
        %307 = vmatprep.subr.bf16.mxu0 0
        %308 = vmatpush1.bf16.msra.mxu0 0
        %309 = vmatprep.subr.bf16.mxu0 0
        %310 = vmatpush1.bf16.msra.mxu0 0
        %311 = vmatprep.subr.bf16.mxu0 0
        %312 = vmatpush1.bf16.msra.mxu0 0
        %313 = vmatprep.subr.bf16.mxu0 0
        %314 = vmatpush1.bf16.msra.mxu0 0
        %315 = vmatprep.subr.bf16.mxu0 0
        %316 = vmatpush1.bf16.msra.mxu0 0
        %317 = vmatprep.subr.bf16.mxu0 0
        %318 = vmatpush1.bf16.msra.mxu0 0
        %319 = vmatprep.subr.bf16.mxu0 0
        %320 = vmatpush1.bf16.msra.mxu0 0
        %321 = vmatprep.subr.bf16.mxu0 0
        %322 = vmatpush1.bf16.msra.mxu0 0
        %323 = vmatprep.subr.bf16.mxu0 0
        %324 = vmatpush1.bf16.msra.mxu0 0
        %325 = vmatprep.subr.bf16.mxu0 0
        %326 = vmatpush1.bf16.msra.mxu0 0
        %327 = vmatprep.subr.bf16.mxu0 0
        %328 = vmatpush1.bf16.msra.mxu0 0
        %329 = vmatprep.mubr.bf16.mxu0 0
        %330 = vmatmul.mubr.bf16.gmra.mrb[0].mxu0 %v267
        %v331 = vpop.f32.mrb[0].mxu0
        %v332 = vadd.f32 %v191, %v331
        %v333 = vpop.f32.mrb[0].mxu0
        %v334 = vadd.f32 %v191, %v333
        %v335 = vpop.f32.mrb[0].mxu0
        %v336 = vpop.f32.mrb[0].mxu0
        %337 = vdwg.mxu0
        %338 = vmatprep.subr.bf16.mxu0 %v244
        %339 = vmatpush1.bf16.msra.mxu0 %v243
        %340 = vmatprep.subr.bf16.mxu0 %v283
        %341 = vmatpush1.bf16.msra.mxu0 %v280
        %342 = vmatprep.subr.bf16.mxu0 0
        %343 = vmatpush1.bf16.msra.mxu0 0
        %344 = vmatprep.subr.bf16.mxu0 0
        %345 = vmatpush1.bf16.msra.mxu0 0
        %346 = vmatprep.subr.bf16.mxu0 0
        %347 = vmatpush1.bf16.msra.mxu0 0
        %348 = vmatprep.subr.bf16.mxu0 0
        %349 = vmatpush1.bf16.msra.mxu0 0
        %350 = vmatprep.subr.bf16.mxu0 0
        %351 = vmatpush1.bf16.msra.mxu0 0
        %352 = vmatprep.subr.bf16.mxu0 0
        %353 = vmatpush1.bf16.msra.mxu0 0
        %354 = vmatprep.subr.bf16.mxu0 0
        %355 = vmatpush1.bf16.msra.mxu0 0
        %356 = vmatprep.subr.bf16.mxu0 0
        %357 = vmatpush1.bf16.msra.mxu0 0
        %358 = vmatprep.subr.bf16.mxu0 0
        %359 = vmatpush1.bf16.msra.mxu0 0
        %360 = vmatprep.subr.bf16.mxu0 0
        %361 = vmatpush1.bf16.msra.mxu0 0
        %362 = vmatprep.subr.bf16.mxu0 0
        %363 = vmatpush1.bf16.msra.mxu0 0
        %364 = vmatprep.subr.bf16.mxu0 0
        %365 = vmatpush1.bf16.msra.mxu0 0
        %366 = vmatprep.subr.bf16.mxu0 0
        %367 = vmatpush1.bf16.msra.mxu0 0
        %368 = vmatprep.subr.bf16.mxu0 0
        %369 = vmatpush1.bf16.msra.mxu0 0
        %370 = vmatprep.mubr.bf16.mxu0 0
        %371 = vmatmul.mubr.bf16.gmra.mrb[0].mxu0 %v267
        %v372 = vpop.f32.mrb[0].mxu0
        %v373 = vadd.f32 %v191, %v372
        %v374 = vpop.f32.mrb[0].mxu0
        %v375 = vadd.f32 %v191, %v374
        %v376 = vpop.f32.mrb[0].mxu0
        %v377 = vpop.f32.mrb[0].mxu0
        %378 = vdwg.mxu0
        %379 = vmatprep.subr.bf16.mxu0 %v246
        %380 = vmatpush1.bf16.msra.mxu0 %v245
        %381 = vmatprep.subr.bf16.mxu0 %v289
        %382 = vmatpush1.bf16.msra.mxu0 %v286
        %383 = vmatprep.subr.bf16.mxu0 0
        %384 = vmatpush1.bf16.msra.mxu0 0
        %385 = vmatprep.subr.bf16.mxu0 0
        %386 = vmatpush1.bf16.msra.mxu0 0
        %387 = vmatprep.subr.bf16.mxu0 0
        %388 = vmatpush1.bf16.msra.mxu0 0
        %389 = vmatprep.subr.bf16.mxu0 0
        %390 = vmatpush1.bf16.msra.mxu0 0
        %391 = vmatprep.subr.bf16.mxu0 0
        %392 = vmatpush1.bf16.msra.mxu0 0
        %393 = vmatprep.subr.bf16.mxu0 0
        %394 = vmatpush1.bf16.msra.mxu0 0
        %395 = vmatprep.subr.bf16.mxu0 0
        %396 = vmatpush1.bf16.msra.mxu0 0
        %397 = vmatprep.subr.bf16.mxu0 0
        %398 = vmatpush1.bf16.msra.mxu0 0
        %399 = vmatprep.subr.bf16.mxu0 0
        %400 = vmatpush1.bf16.msra.mxu0 0
        %401 = vmatprep.subr.bf16.mxu0 0
        %402 = vmatpush1.bf16.msra.mxu0 0
        %403 = vmatprep.subr.bf16.mxu0 0
        %404 = vmatpush1.bf16.msra.mxu0 0
        %405 = vmatprep.subr.bf16.mxu0 0
        %406 = vmatpush1.bf16.msra.mxu0 0
        %407 = vmatprep.subr.bf16.mxu0 0
        %408 = vmatpush1.bf16.msra.mxu0 0
        %409 = vmatprep.subr.bf16.mxu0 0
        %410 = vmatpush1.bf16.msra.mxu0 0
        %411 = vmatprep.mubr.bf16.mxu0 0
        %412 = vmatmul.mubr.bf16.gmra.mrb[0].mxu0 %v267
        %v413 = vpop.f32.mrb[0].mxu0
        %v414 = vadd.f32 %v191, %v413
        %v415 = vpop.f32.mrb[0].mxu0
        %v416 = vadd.f32 %v191, %v415
        %v417 = vpop.f32.mrb[0].mxu0
        %v418 = vpop.f32.mrb[0].mxu0
        %419 = vdwg.mxu0
        %420 = vmatprep.subr.bf16.mxu0 %v248
        %421 = vmatpush1.bf16.msra.mxu0 %v247
        %422 = vmatprep.subr.bf16.mxu0 %v295
        %423 = vmatpush1.bf16.msra.mxu0 %v292
        %424 = vmatprep.subr.bf16.mxu0 0
        %425 = vmatpush1.bf16.msra.mxu0 0
        %426 = vmatprep.subr.bf16.mxu0 0
        %427 = vmatpush1.bf16.msra.mxu0 0
        %428 = vmatprep.subr.bf16.mxu0 0
        %429 = vmatpush1.bf16.msra.mxu0 0
        %430 = vmatprep.subr.bf16.mxu0 0
        %431 = vmatpush1.bf16.msra.mxu0 0
        %432 = vmatprep.subr.bf16.mxu0 0
        %433 = vmatpush1.bf16.msra.mxu0 0
        %434 = vmatprep.subr.bf16.mxu0 0
        %435 = vmatpush1.bf16.msra.mxu0 0
        %436 = vmatprep.subr.bf16.mxu0 0
        %437 = vmatpush1.bf16.msra.mxu0 0
        %438 = vmatprep.subr.bf16.mxu0 0
        %439 = vmatpush1.bf16.msra.mxu0 0
        %440 = vmatprep.subr.bf16.mxu0 0
        %441 = vmatpush1.bf16.msra.mxu0 0
        %442 = vmatprep.subr.bf16.mxu0 0
        %443 = vmatpush1.bf16.msra.mxu0 0
        %444 = vmatprep.subr.bf16.mxu0 0
        %445 = vmatpush1.bf16.msra.mxu0 0
        %446 = vmatprep.subr.bf16.mxu0 0
        %447 = vmatpush1.bf16.msra.mxu0 0
        %448 = vmatprep.subr.bf16.mxu0 0
        %449 = vmatpush1.bf16.msra.mxu0 0
        %450 = vmatprep.subr.bf16.mxu0 0
        %451 = vmatpush1.bf16.msra.mxu0 0
        %452 = vmatprep.mubr.bf16.mxu0 0
        %453 = vmatmul.mubr.bf16.gmra.mrb[0].mxu0 %v267
        %v454 = vpop.f32.mrb[0].mxu0
        %v455 = vadd.f32 %v191, %v454
        %v456 = vpop.f32.mrb[0].mxu0
        %v457 = vadd.f32 %v191, %v456
        %v458 = vpop.f32.mrb[0].mxu0
        %v459 = vpop.f32.mrb[0].mxu0
        %460 = vdwg.mxu0
        %v461 = vpack.c.bf16 %v332, %v332
        %v462 = vpack.c.bf16 %v334, %v334
        %v463 = vpack.c.bf16 %v373, %v373
        %v464 = vpack.c.bf16 %v375, %v375
        %v465 = vpack.c.bf16 %v414, %v414
        %v466 = vpack.c.bf16 %v416, %v416
        %v467 = vpack.c.bf16 %v455, %v455
        %v468 = vpack.c.bf16 %v457, %v457
        %v477 = vunpack.c.l.b16 %v461
        %v478 = vunpack.c.l.b16 %v462
        %v479 = vunpack.c.l.b16 %v463
        %v480 = vunpack.c.l.b16 %v464
        %v481 = vunpack.c.l.b16 %v465
        %v482 = vunpack.c.l.b16 %v466
        %v483 = vunpack.c.l.b16 %v467
        %v484 = vunpack.c.l.b16 %v468
        %v485 = vpack.c.b16 %v478, %v477
        %v486 = vpack.c.b16 %v480, %v479
        %v487 = vpack.c.b16 %v482, %v481
        %v488 = vpack.c.b16 %v484, %v483
        %493 = vst [vmem:[%s163] sm:$0xff] %v485
        %494 = vst [vmem:[%s163 + $0x8] sm:$0xff] %v486
        %495 = vst [vmem:[%s163 + $0x10] sm:$0xff] %v487
        %496 = vst [vmem:[%s163 + $0x18] sm:$0xff] %v488
        %s497 = sand.u32 %s93, 1
        %s498 = scalar_lea.sflag [#allocation3], %s497
        %s499 = sand.u32 %s93, 1
        %s500 = smul.addr %s499, 32
        %s501 = scalar_lea.vmem [#allocation2], %s500
        // Predicated region
        $region33: #{tpu_custom_call.1} parent=31 // pred_check
          %p502 = pneg %p103
        $region34: #{tpu_custom_call.1} parent=31 // pred_check_branch
          %504 = sbr.rel (%p502) target = $region36
        $region35: #{tpu_custom_call.1} parent=31 // pred_region
          %s506 = ssub.s32 512, 512
          %507 = vsyncadd %s498, %s506
          %s508 = smul.addr %s17, 8
          %s509 = smul.addr %s508, 64
          %s510 = scalar_lea.hbm %s3, %s509
          %s512 = sshll.u32 %s501, 4
          %s513 = int_to_ptr.vmem [resolvable:$true] %s512
          %515 = dma.vmem_to_hbm [thread:$0]  %s513, 512, %s510, %s498
        $region36: #{tpu_custom_call.1} parent=31 // pred_fallthru
          _
      $region32: #{tpu_custom_call.1} parent=5 // pred_fallthru
        _
      %p516 = scmp.le.s32.totalorder 2, %s12
      // Predicated region
      $region37: #{tpu_custom_call.1} parent=5 // pred_check
        %p517 = pneg %p516
      $region38: #{tpu_custom_call.1} parent=5 // pred_check_branch
        %519 = sbr.rel (%p517) target = $region40
      $region39: #{tpu_custom_call.1} parent=5 // pred_region
        %s520 = ssub.s32 %s12, 2
        // Predicated region
        $region41: #{tpu_custom_call.1} parent=39 // pred_check
          %p521 = pneg %p109
        $region42: #{tpu_custom_call.1} parent=39 // pred_check_branch
          %523 = sbr.rel (%p521) target = $region44
        $region43: #{tpu_custom_call.1} parent=39 // pred_region
          %s524 = sand.u32 %s94, 1
          %s525 = scalar_lea.sflag [#allocation3], %s524
          %s526 = sand.u32 %s94, 1
          %s527 = smul.addr %s526, 32
          %s528 = scalar_lea.vmem [#allocation2], %s527
          %529 = dma.done %s525, 512
        $region44: #{tpu_custom_call.1} parent=39 // pred_fallthru
          _
      $region40: #{tpu_custom_call.1} parent=5 // pred_fallthru
        _
    $region6: #{tpu_custom_call.1} parent=1 // loop_footer
      %s16 = sadd.s32 1, %s12
    $region7: #{tpu_custom_call.1} parent=1 // loop_footer_branch
      %11 = sbr.rel target = $region3
    $region8: #{tpu_custom_call.1} parent=1 // loop_exit
      _
    %530 = vsyncpa [#allocation3], 1
    %s531 = scalar_lea.sflag [#allocation3], 1
    %532 = vsyncpa %s531, 1

</llo_original>
